<compile_context>
chip_gen: v7x
topology: tpu7x:2x2x1
jax: 0.10.0
libtpu: 0.0.40
codegen_flags: <defaults>
</compile_context>

<pallas_src>
import jax
import jax.numpy as jnp
from jax.experimental import pallas as pl
from jax.experimental.pallas import tpu as pltpu


def _dma_flatten_kernel(x_ref, o_ref, sem):
    # One HBM->HBM DMA of the whole (B, feat_dim) slab.  No VMEM staging.
    cp = pltpu.make_async_copy(x_ref, o_ref, sem)
    cp.start()
    cp.wait()


def flatten_extractor(x: jax.Array, *, copy_with_pallas: bool = True) -> jax.Array:
    """Pallas equivalent of FlattenExtractor.forward (nn.Flatten).

    x: (B, *obs_shape) -> (B, prod(obs_shape)), row-major (torch.nn.Flatten order).

    copy_with_pallas=False returns the metadata-only reshape (zero HBM traffic),
    which is the recommended production path; True routes the bytes through a
    single grid-free HBM->HBM DMA inside a Pallas kernel.
    """
    B = x.shape[0]
    feat_dim = 1
    for d in x.shape[1:]:
        feat_dim *= d

    # Metadata-only, row-major flatten — identical element order to nn.Flatten.
    x2 = x.reshape(B, feat_dim)

    if not copy_with_pallas:
        # FlattenExtractor is a pure reshape; XLA does this for free.
        return x2

    itemsize = jnp.dtype(x.dtype).itemsize
    nbytes = B * feat_dim * itemsize

    return pl.pallas_call(
        _dma_flatten_kernel,
        out_shape=jax.ShapeDtypeStruct((B, feat_dim), x.dtype),
        in_specs=[pl.BlockSpec(memory_space=pl.ANY)],
        out_specs=pl.BlockSpec(memory_space=pl.ANY),
        scratch_shapes=[pltpu.SemaphoreType.DMA],
        cost_estimate=pl.CostEstimate(
            flops=0, transcendentals=0, bytes_accessed=2 * nbytes
        ),
    )(x2)


if __name__ == "__main__":
    key = jax.random.PRNGKey(0)

    # Small NCHW observation batch: batch=2, channels=4, spatial=16x16.
    x = jax.random.normal(key, (2, 4, 16, 16), dtype=jnp.float32)
    y = flatten_extractor(x)
    jax.block_until_ready(y)
    y_ref = x.reshape(x.shape[0], -1)
    assert y.shape == (2, 4 * 16 * 16), y.shape
    assert jnp.array_equal(y, y_ref), "mismatch vs reference flatten"

    # Non-128-aligned feature dim (feat_dim = 189) — no masked-store penalty on
    # the DMA path, and no (8,128) tiling constraints to satisfy.
    x2 = jax.random.normal(key, (4, 3, 7, 9), dtype=jnp.float32)
    y2 = flatten_extractor(x2)
    jax.block_until_ready(y2)
    assert jnp.array_equal(y2, x2.reshape(4, -1)), "mismatch on unaligned feat_dim"

    # Sub-32-bit dtype (bf16) — DMA copy is dtype-agnostic (just bytes).
    x3 = jax.random.normal(key, (2, 8, 8, 8), dtype=jnp.bfloat16)
    y3 = flatten_extractor(x3)
    jax.block_until_ready(y3)
    assert jnp.array_equal(y3, x3.reshape(2, -1)), "mismatch on bf16 input"

    # Zero-copy path (metadata-only reshape) also matches.
    y4 = flatten_extractor(x, copy_with_pallas=False)
    jax.block_until_ready(y4)
    assert jnp.array_equal(y4, y_ref), "mismatch on zero-copy path"

    print("KERNEL_OK")
</pallas_src>

<mosaic_0001>
module attributes {stable_mosaic.version = 11 : i64} {
  func.func @_dma_flatten_kernel(%arg0: memref<2x1024xf32, #tpu.memory_space<any>>, %arg1: memref<2x1024xf32, #tpu.memory_space<any>>, %arg2: memref<!tpu.dma_semaphore, #tpu.memory_space<semaphore_mem>>) attributes {dimension_semantics = [], scalar_prefetch = 0 : i64, scratch_operands = 1 : i64, tpu.core_type = #tpu.core_type<tc>} {
    tpu.enqueue_dma source(%arg0 : memref<2x1024xf32, #tpu.memory_space<any>>) target(%arg1 : memref<2x1024xf32, #tpu.memory_space<any>>) target_semaphore(%arg2 : memref<!tpu.dma_semaphore, #tpu.memory_space<semaphore_mem>>)
    tpu.wait_dma2 semaphore(%arg2 : memref<!tpu.dma_semaphore, #tpu.memory_space<semaphore_mem>>) src(%arg0 : memref<2x1024xf32, #tpu.memory_space<any>>) dst(%arg1 : memref<2x1024xf32, #tpu.memory_space<any>>)
    return
  }
}

</mosaic_0001>

<llo_original>
// kernel: tpu_custom_call.1
$region0: #{tpu_custom_call.1}
  #allocation0 [shape = 'u32[]', space=smem, size = 0x4, offset = 0x4, fixed_abs, tag = 'smem constant byte address 0x4 - core index']
  #allocation1 [shape = 'u32[144,128]{1,0:T(1,128)}', space=vmem, size = 0x12000, scoped, tag = 'internal scratch']
  #allocation2 [shape = 's32[1]{0}', space=sflag, size = 0x4, scoped, tag = 'scratch operand']
  #allocation3 [shape = 's32[]', space=sflag, size = 0x4, offset = 0, fixed_abs, tag = 'sflag constant byte address 0x0 - dummy sync flag']
  #allocation4 [shape = 'u32[0]{0}', space=smem, size = 0, offset = 0, fixed_abs, tag = 'smem constant byte address 0x0 - null']
  %s0 = inlined_call_operand.hbm [shape: f32[2,1024], index: 0, kind: input, shape index: {}]
  %s1 = inlined_call_operand.hbm [shape: f32[2,1024], index: 1, kind: output, shape index: {}]
  %s2 = sld [smem:[#allocation0]]
  $region2: #{tpu_custom_call.1} parent=0
    _
  %s4 = ssub.s32 1, %s2
  %s5 = scalar_select 0, %s4, %s2
  %s7 = sshll.u32 1, 14
  %s8 = sxor.u32 4294967295, %s7
  %s11 = sshll.u32 3, 24
  %s12 = sxor.u32 4294967295, %s11
  %s13 = sand.u32 0, %s12
  %s15 = sor.u32 %s13, 0
  %18 = dma.general %s0, 256, %s1, [#allocation2], [#allocation3], [#allocation4], %s15, 0
  %s19 = smul.u32 2, 1
  %s20 = smul.u32 %s19, 8
  %s21 = sshll.u32 %s20, 4
  %22 = dma.done [#allocation2], %s21
  %23 = vsyncmov [#allocation2]
  %s24 = vpop.sfrf %23
  %p25 = scmp.eq.s32.totalorder %s24, 0
  %p26 = pneg %p25
  %28 = shalt.err (%p26)

</llo_original>
